<compile_context>
chip_gen: v5e
topology: v5e:2x2
jax: 0.10.0
libtpu: 0.0.40
codegen_flags: <defaults>
</compile_context>

<pallas_src>
import math

import jax
import jax.numpy as jnp
from jax.experimental import pallas as pl
from jax.experimental.pallas import tpu as pltpu


def _drop_path_kernel(scale_ref, x_ref, o_ref):
    # scale_ref: (block_b, 1) f32 per-sample scale (0.0 or 1/keep_prob).
    # x_ref/o_ref: (block_b, block_c) tile in VMEM; one lane-broadcast multiply.
    o_ref[...] = x_ref[...] * scale_ref[...].astype(x_ref.dtype)


def _round_up(x, m):
    return ((x + m - 1) // m) * m


def _choose_blocks(B, C, itemsize):
    """Pick (block_b, block_c) targeting ~4 MiB lane-dense blocks."""
    lane = 128
    sublane = max(8, 32 // itemsize)                 # 8 f32 / 16 bf16 / 32 int8
    c_aligned = _round_up(C, lane)
    target = 4 * 1024 * 1024                         # HBM-roofline plateau block

    if B <= sublane:
        block_b, b_growable = B, False               # full batch dim (always legal)
    else:
        block_b, b_growable = sublane, True

    max_c = max(lane, (target // (block_b * itemsize)) // lane * lane)
    if max_c >= c_aligned:
        block_c = c_aligned
        if b_growable:                               # small C: spend budget on B
            max_b = max(sublane, (target // (block_c * itemsize)) // sublane * sublane)
            if max_b > block_b:
                n_i = pl.cdiv(B, max_b)
                block_b = min(_round_up(pl.cdiv(B, n_i), sublane), max_b)
    else:                                            # big C: balanced 128-lane blocks
        n_j = pl.cdiv(c_aligned, max_c)
        block_c = _round_up(pl.cdiv(c_aligned, n_j), lane)

    # v7x has 2 TensorCores: guarantee >= 2 "parallel" grid blocks for any
    # non-tiny tensor so both cores issue DMAs (one extra cheap step elsewhere).
    if B * C * itemsize > (2 << 20) and pl.cdiv(B, block_b) * pl.cdiv(C, block_c) == 1:
        if block_c > lane:
            block_c = _round_up(pl.cdiv(block_c, 2), lane)
        elif b_growable and block_b > sublane:
            block_b = _round_up(pl.cdiv(block_b, 2), sublane)

    return block_b, block_c


def _pallas_scale(x, scale, donate):
    """y[b, ...] = x[b, ...] * scale[b, 0] via a tiled lane-broadcast multiply."""
    B = x.shape[0]
    C = int(math.prod(x.shape[1:]))
    itemsize = jnp.dtype(x.dtype).itemsize

    x_flat = x.reshape(B, C)
    block_b, block_c = _choose_blocks(B, C, itemsize)
    grid = (pl.cdiv(B, block_b), pl.cdiv(C, block_c))

    out = pl.pallas_call(
        _drop_path_kernel,
        out_shape=jax.ShapeDtypeStruct((B, C), x.dtype),
        grid_spec=pltpu.PrefetchScalarGridSpec(
            num_scalar_prefetch=0,
            grid=grid,
            in_specs=[
                pl.BlockSpec((block_b, 1), lambda i, j: (i, 0)),
                pl.BlockSpec((block_b, block_c), lambda i, j: (i, j)),
            ],
            out_specs=pl.BlockSpec((block_b, block_c), lambda i, j: (i, j)),
        ),
        compiler_params=pltpu.CompilerParams(
            dimension_semantics=("parallel", "parallel"),
            vmem_limit_bytes=32 * 1024 * 1024,
        ),
        cost_estimate=pl.CostEstimate(
            flops=B * C,
            transcendentals=0,
            bytes_accessed=2 * B * C * itemsize + B * 4,
        ),
        input_output_aliases=({1: 0} if donate else {}),
    )(scale, x_flat)

    return out.reshape(x.shape)


def _make_scaled(donate):
    @jax.custom_vjp
    def scaled(x, scale):
        return _pallas_scale(x, scale, donate)

    def fwd(x, scale):
        return _pallas_scale(x, scale, donate), scale

    def bwd(scale, g):
        # d/dx (x * scale) = scale; the random mask/scale carries no gradient.
        return _pallas_scale(g, scale, donate), jnp.zeros_like(scale)

    scaled.defvjp(fwd, bwd)
    return scaled


_scaled = _make_scaled(donate=False)
_scaled_donated = _make_scaled(donate=True)


def drop_path(x, drop_prob, training, key, donate_x=False):
    """JAX/Pallas equivalent of DropPath.forward (per-sample stochastic depth)."""
    if drop_prob is None or float(drop_prob) == 0.0 or not training:
        return x

    keep_prob = 1.0 - float(drop_prob)
    B = x.shape[0]
    # Per-sample Bernoulli(keep_prob) mask -> scale: B floats of glue; the hot
    # streaming multiply runs in the kernel.
    u = jax.random.uniform(key, (B, 1), dtype=jnp.float32)
    scale = jnp.floor(keep_prob + u) / keep_prob          # (B, 1): 0 or 1/keep_prob

    f = _scaled_donated if donate_x else _scaled
    return f(x, scale)


class DropPath:
    """Drop paths (Stochastic Depth) per sample, Pallas-backed."""

    def __init__(self, drop_prob=None):
        self.drop_prob = drop_prob
        self.training = True

    def __call__(self, x, key, donate_x=False):
        return drop_path(x, self.drop_prob, self.training, key, donate_x=donate_x)


if __name__ == "__main__":
    key = jax.random.PRNGKey(0)
    kx, kdrop, kx2, kdrop2 = jax.random.split(key, 4)

    keep_prob = 1.0 - 0.25
    module = DropPath(drop_prob=0.25)
    module.training = True

    # --- training mode, lane-aligned case: (batch, seq, hidden) = (2, 8, 32) ---
    B, N, D = 2, 8, 32
    x = jax.random.normal(kx, (B, N, D), dtype=jnp.float32)
    y = jax.block_until_ready(module(x, kdrop))

    u = jax.random.uniform(kdrop, (B, 1), dtype=jnp.float32)
    mask = jnp.floor(keep_prob + u).reshape(B, 1, 1)
    y_ref = x / keep_prob * mask
    assert jnp.allclose(y, y_ref, rtol=1e-5, atol=1e-6), "training-mode mismatch"

    # --- misaligned trailing dims (pad-free masked edge-block path): C = 320 ---
    B2, N2, D2 = 3, 8, 40
    x2 = jax.random.normal(kx2, (B2, N2, D2), dtype=jnp.float32)
    y2 = jax.block_until_ready(module(x2, kdrop2))
    u2 = jax.random.uniform(kdrop2, (B2, 1), dtype=jnp.float32)
    mask2 = jnp.floor(keep_prob + u2).reshape(B2, 1, 1)
    y2_ref = x2 / keep_prob * mask2
    assert jnp.allclose(y2, y2_ref, rtol=1e-5, atol=1e-6), "edge-block mismatch"

    # --- donated-buffer path (input_output_aliases={1: 0}) ---
    y3 = jax.block_until_ready(module(x2, kdrop2, donate_x=True))
    assert jnp.allclose(y3, y2_ref, rtol=1e-5, atol=1e-6), "donate_x mismatch"

    # --- gradient: custom_vjp reuses the same kernel for the backward pass ---
    g = jax.grad(lambda xx: drop_path(xx, 0.25, True, kdrop).sum())(x)
    g = jax.block_until_ready(g)
    g_ref = jnp.broadcast_to(mask / keep_prob, x.shape)
    assert jnp.allclose(g, g_ref, rtol=1e-5, atol=1e-6), "grad mismatch"

    # --- eval mode: identity ---
    module.training = False
    y_eval = jax.block_until_ready(module(x, kdrop))
    assert jnp.allclose(y_eval, x), "eval-mode mismatch"

    print("KERNEL_OK")
</pallas_src>

<mosaic_0001>
module attributes {stable_mosaic.version = 11 : i64} {
  func.func @_drop_path_kernel(%arg0: i32, %arg1: i32, %arg2: memref<2x1xf32, #tpu.memory_space<vmem>>, %arg3: memref<2x256xf32, #tpu.memory_space<vmem>>, %arg4: memref<2x256xf32, #tpu.memory_space<vmem>>) attributes {dimension_semantics = [#tpu.dimension_semantics<parallel>, #tpu.dimension_semantics<parallel>], iteration_bounds = array<i64: 1, 1>, scalar_prefetch = 0 : i64, scratch_operands = 0 : i64, tpu.core_type = #tpu.core_type<tc>, window_params = [{transform_indices = @transform_0, window_bounds = array<i64: 2, 1>}, {transform_indices = @transform_1, window_bounds = array<i64: 2, 256>}, {transform_indices = @transform_2, window_bounds = array<i64: 2, 256>}]} {
    %c0 = arith.constant 0 : index
    %c0_0 = arith.constant 0 : index
    %0 = vector.load %arg3[%c0, %c0_0] : memref<2x256xf32, #tpu.memory_space<vmem>>, vector<2x256xf32>
    %c0_1 = arith.constant 0 : index
    %c0_2 = arith.constant 0 : index
    %1 = vector.load %arg2[%c0_1, %c0_2] : memref<2x1xf32, #tpu.memory_space<vmem>>, vector<2x1xf32>
    %2 = vector.broadcast %1 : vector<2x1xf32> to vector<2x256xf32>
    %3 = arith.mulf %0, %2 : vector<2x256xf32>
    %c0_3 = arith.constant 0 : index
    %c0_4 = arith.constant 0 : index
    %4 = vector.load %arg4[%c0_3, %c0_4] : memref<2x256xf32, #tpu.memory_space<vmem>>, vector<2x256xf32>
    tpu.vector_store %arg4[%c0_3, %c0_4], %3 {strides = array<i32>} : memref<2x256xf32, #tpu.memory_space<vmem>>, vector<2x256xf32>,
    return
  }
  func.func @transform_0(%arg0: i32, %arg1: i32) -> (i32, i32) {
    %c0_i32 = arith.constant 0 : i32
    %c0_i32_0 = arith.constant 0 : i32
    return %arg0, %c0_i32 : i32, i32
  }
  func.func @transform_1(%arg0: i32, %arg1: i32) -> (i32, i32) {
    %c0_i32 = arith.constant 0 : i32
    return %arg0, %arg1 : i32, i32
  }
  func.func @transform_2(%arg0: i32, %arg1: i32) -> (i32, i32) {
    %c0_i32 = arith.constant 0 : i32
    return %arg0, %arg1 : i32, i32
  }
}

</mosaic_0001>

<llo_original>
// kernel: tpu_custom_call.1
$region0: #{tpu_custom_call.1}
  #allocation0 [shape = 'u32[]', space=smem, size = 0x4, offset = 0x4, fixed_abs, tag = 'smem constant byte address 0x4 - core index']
  #allocation1 [shape = 'u32[72,128]{1,0:T(1,128)}', space=vmem, size = 0x9000, scoped, tag = 'internal scratch']
  %s0 = inlined_call_operand.vmem [shape: f32[2,1], index: 0, kind: input, shape index: {}]
  %s1 = inlined_call_operand.hbm [shape: f32[2,256], index: 1, kind: input, shape index: {}]
  %s2 = inlined_call_operand.hbm [shape: f32[2,256], index: 2, kind: output, shape index: {}]
  %s3 = sld [smem:[#allocation0]]
  $region22: #{tpu_custom_call.1} parent=0
    _
  %s5 = ssub.s32 1, %s3
  %s6 = scalar_select 0, %s5, %s3
  $region1: #{tpu_custom_call.1} parent=0
    #allocation2 [shape = 'u8[2048]{0}', space=vmem, size = 0x800, scoped, tag = 'input window, operand 1, single buffered']
    #allocation3 [shape = 's32[1]{0}', space=sflag, size = 0x4, scoped, tag = 'scoped memory for tpu_custom_call.1']
    #allocation4 [shape = 's32[1]{0}', space=sflag, size = 0x4, scoped, tag = 'scoped memory for tpu_custom_call.1']
    #allocation5 [shape = 'u8[2048]{0}', space=vmem, size = 0x800, scoped, tag = 'output window, operand 0, single buffered']
    %7 = vsyncpa [#allocation3], 0
    %8 = vsyncpa [#allocation4], 0
    // Predicated region
    $region2: #{tpu_custom_call.1} parent=1 // pred_check
      _
    $region3: #{tpu_custom_call.1} parent=1 // pred_check_branch
      %10 = sbr.rel (0) target = $region5
    $region4: #{tpu_custom_call.1} parent=1 // pred_region
      _
    $region5: #{tpu_custom_call.1} parent=1 // pred_fallthru
      _
    // Predicated region
    $region6: #{tpu_custom_call.1} parent=1 // pred_check
      _
    $region7: #{tpu_custom_call.1} parent=1 // pred_check_branch
      %12 = sbr.rel (0) target = $region9
    $region8: #{tpu_custom_call.1} parent=1 // pred_region
      %14 = vsyncadd [#allocation3], 0
      %s16 = sshll.u32 %s1, 4
      %s17 = int_to_ptr.hbm [resolvable:$true] %s16
      %s18 = sshll.u32 [#allocation2], 4
      %s19 = int_to_ptr.vmem [resolvable:$true] %s18
      %21 = dma.hbm_to_vmem [thread:$0]  %s17, 64, %s19, [#allocation3]
    $region9: #{tpu_custom_call.1} parent=1 // pred_fallthru
      _
    // Predicated region
    $region10: #{tpu_custom_call.1} parent=1 // pred_check
      _
    $region11: #{tpu_custom_call.1} parent=1 // pred_check_branch
      %23 = sbr.rel (0) target = $region13
    $region12: #{tpu_custom_call.1} parent=1 // pred_region
      %25 = dma.done [#allocation3], 64
    $region13: #{tpu_custom_call.1} parent=1 // pred_fallthru
      _
    %v26 = vld [vmem:[#allocation2] sm:$0xf]
    %v27 = vld [vmem:[%s0] sm:$0x3]
    %29 = vset.pattern.permute.xlu0 0
    %30 = vperm.xlu0 %29, %v27
    %v31 = vpop.permute.xlu0 %30
    %v33 = vunpack.c.l.s4 269488144
    %v34 = vunpack.c.0.s8 %v33
    %v35 = vperm.slane %v31, %v34
    %v37 = vmul.f32 %v26, %v35
    %38 = vst [vmem:[#allocation5] sm:$0xf] %v37
    // Predicated region
    $region14: #{tpu_custom_call.1} parent=1 // pred_check
      _
    $region15: #{tpu_custom_call.1} parent=1 // pred_check_branch
      %40 = sbr.rel (0) target = $region17
    $region16: #{tpu_custom_call.1} parent=1 // pred_region
      %42 = vsyncadd [#allocation4], 0
      %s44 = sshll.u32 [#allocation5], 4
      %s45 = int_to_ptr.vmem [resolvable:$true] %s44
      %s46 = sshll.u32 %s2, 4
      %s47 = int_to_ptr.hbm [resolvable:$true] %s46
      %49 = dma.vmem_to_hbm [thread:$0]  %s45, 64, %s47, [#allocation4]
    $region17: #{tpu_custom_call.1} parent=1 // pred_fallthru
      _
    // Predicated region
    $region18: #{tpu_custom_call.1} parent=1 // pred_check
      _
    $region19: #{tpu_custom_call.1} parent=1 // pred_check_branch
      %51 = sbr.rel (0) target = $region21
    $region20: #{tpu_custom_call.1} parent=1 // pred_region
      %53 = dma.done [#allocation4], 64
    $region21: #{tpu_custom_call.1} parent=1 // pred_fallthru
      _
    %54 = vsyncpa [#allocation3], 1
    %55 = vsyncpa [#allocation4], 1

</llo_original>
